<compile_context>
chip_gen: v7x
topology: tpu7x:2x2x1
jax: 0.10.0
libtpu: 0.0.40
codegen_flags: <defaults>
</compile_context>

<pallas_src>
import math
from functools import partial

import jax
import jax.numpy as jnp
from jax.experimental import pallas as pl
from jax.experimental.pallas import tpu as pltpu

_VMEM_LIMIT = 48 * 1024 * 1024  # safe scoped-VMEM budget on v5e/v6e/v7x


def _fit(dim, pref, align):
    """Largest tile <= pref that is a multiple of `align` and divides dim.

    Falls back to the full dimension (always legal for BlockSpec).
    TODO(synk): the full-dim fallback can blow up the block footprint for
    awkward dims on v7x's 64 MiB VMEM; acceptable for GPT-2-like shapes."""
    if dim <= pref:
        return dim
    t = (pref // align) * align
    while t >= align:
        if dim % t == 0:
            return t
        t -= align
    return dim


# ----------------------------------------------------------------------------
# Fused LayerNorm + Linear (+ optional GELU) kernel.
#   grid=(M/tm, N/tn); K kept whole so LN row stats are exact.  The normalized
#   activations are cached in VMEM at j==0 and reused across the N tiles.
# ----------------------------------------------------------------------------

def _ln_linear_kernel(x_ref, g_ref, bln_ref, w_ref, b_ref, o_ref, xn_ref, *,
                      activation, eps):
    # j (N axis) is innermost and the x block index is constant across j, so
    # LayerNorm is computed once per row tile and cached in bf16 VMEM.
    @pl.when(pl.program_id(1) == 0)
    def _():
        x = x_ref[...].astype(jnp.float32)                    # (tm, K)
        mu = jnp.mean(x, axis=-1, keepdims=True)
        var = jnp.mean(jnp.square(x - mu), axis=-1, keepdims=True)
        xn = (x - mu) * jax.lax.rsqrt(var + eps)
        xn_ref[...] = (xn * g_ref[...] + bln_ref[...]).astype(jnp.bfloat16)

    y = jnp.dot(xn_ref[...], w_ref[...],
                preferred_element_type=jnp.float32)           # bf16 MXU, f32 acc
    y = y + b_ref[...]
    if activation == "gelu":
        y = jax.nn.gelu(y, approximate=True)                  # tanh GELU (EUP)
    o_ref[...] = y.astype(o_ref.dtype)


def ln_linear_pallas(x, gamma, beta, w, b, eps, activation=None,
                     out_dtype=jnp.bfloat16, tm=256, tn=512):
    M, K = x.shape
    K2, N = w.shape
    assert K == K2
    tm = _fit(M, tm, 8)
    tn = _fit(N, tn, 128)
    grid = (M // tm, N // tn)
    return pl.pallas_call(
        partial(_ln_linear_kernel, activation=activation, eps=eps),
        out_shape=jax.ShapeDtypeStruct((M, N), out_dtype),
        grid=grid,
        in_specs=[
            pl.BlockSpec((tm, K), lambda i, j: (i, 0)),
            pl.BlockSpec((1, K), lambda i, j: (0, 0)),
            pl.BlockSpec((1, K), lambda i, j: (0, 0)),
            pl.BlockSpec((K, tn), lambda i, j: (0, j)),
            pl.BlockSpec((1, tn), lambda i, j: (0, j)),
        ],
        out_specs=pl.BlockSpec((tm, tn), lambda i, j: (i, j)),
        scratch_shapes=[pltpu.VMEM((tm, K), jnp.bfloat16)],   # cached LN(x)
        compiler_params=pltpu.CompilerParams(
            # N axis "arbitrary" so the LN cache is reused sequentially per i.
            dimension_semantics=("parallel", "arbitrary"),
            vmem_limit_bytes=_VMEM_LIMIT),
    )(x.astype(jnp.bfloat16),
      gamma.reshape(1, K).astype(jnp.float32),
      beta.reshape(1, K).astype(jnp.float32),
      w.astype(jnp.bfloat16), b.reshape(1, N).astype(jnp.float32))


# ----------------------------------------------------------------------------
# K-tiled Linear kernel with f32 accumulator (+ optional GELU / residual add).
# ----------------------------------------------------------------------------

def _linear_kernel(x_ref, w_ref, b_ref, o_ref, acc_ref, *, activation):
    @pl.when(pl.program_id(2) == 0)
    def _():
        acc_ref[...] = jnp.zeros_like(acc_ref)

    acc_ref[...] += jnp.dot(x_ref[...], w_ref[...],
                            preferred_element_type=jnp.float32)

    @pl.when(pl.program_id(2) == pl.num_programs(2) - 1)
    def _():
        y = acc_ref[...] + b_ref[...]
        if activation == "gelu":
            y = jax.nn.gelu(y, approximate=True)
        o_ref[...] = y.astype(o_ref.dtype)


def _linear_res_kernel(x_ref, w_ref, b_ref, res_ref, o_ref, acc_ref, *,
                       activation):
    @pl.when(pl.program_id(2) == 0)
    def _():
        acc_ref[...] = jnp.zeros_like(acc_ref)

    acc_ref[...] += jnp.dot(x_ref[...], w_ref[...],
                            preferred_element_type=jnp.float32)

    @pl.when(pl.program_id(2) == pl.num_programs(2) - 1)
    def _():
        y = acc_ref[...] + b_ref[...]
        if activation == "gelu":
            y = jax.nn.gelu(y, approximate=True)
        y = y + res_ref[...].astype(jnp.float32)   # fused residual add (bf16 in)
        o_ref[...] = y.astype(o_ref.dtype)


def linear_pallas(x, w, b, residual=None, activation=None,
                  out_dtype=jnp.bfloat16, tm=256, tn=512, tk=512):
    M, K = x.shape
    K2, N = w.shape
    assert K == K2
    tm = _fit(M, tm, 8)
    tn = _fit(N, tn, 128)
    tk = _fit(K, tk, 128)
    grid = (M // tm, N // tn, K // tk)

    x = x.astype(jnp.bfloat16)
    w = w.astype(jnp.bfloat16)
    b = b.reshape(1, N).astype(jnp.float32)

    in_specs = [
        pl.BlockSpec((tm, tk), lambda i, j, k: (i, k)),
        pl.BlockSpec((tk, tn), lambda i, j, k: (k, j)),
        pl.BlockSpec((1, tn), lambda i, j, k: (0, j)),
    ]
    args = [x, w, b]
    if residual is not None:
        in_specs.append(pl.BlockSpec((tm, tn), lambda i, j, k: (i, j)))
        args.append(residual.astype(jnp.bfloat16))
        kernel = partial(_linear_res_kernel, activation=activation)
    else:
        kernel = partial(_linear_kernel, activation=activation)

    return pl.pallas_call(
        kernel,
        out_shape=jax.ShapeDtypeStruct((M, N), out_dtype),
        grid=grid,
        in_specs=in_specs,
        out_specs=pl.BlockSpec((tm, tn), lambda i, j, k: (i, j)),
        scratch_shapes=[pltpu.VMEM((tm, tn), jnp.float32)],
        compiler_params=pltpu.CompilerParams(
            dimension_semantics=("parallel", "parallel", "arbitrary"),
            vmem_limit_bytes=_VMEM_LIMIT),
    )(*args)


# ----------------------------------------------------------------------------
# Flash-style attention kernel reading q/k/v directly from the fused qkv
# activation [B, S, 3D]; grid=(B, q-tiles, kv-tiles); online softmax scratch;
# heads are formed in-kernel; output is lane-dense [B, S, D].
# ----------------------------------------------------------------------------

def _flash_attn_kernel(q_ref, kv_ref, am_ref, o_ref,
                       q_sc, m_sc, l_sc, acc_sc, *, n_head, d_head,
                       masked_bias):
    qi = pl.program_id(1)
    ki = pl.program_id(2)
    H, Dh = n_head, d_head
    D = H * Dh
    tq = q_ref.shape[1]
    tkv = kv_ref.shape[1]

    @pl.when(ki == 0)
    def _():
        # Q heads (scale already folded into the c_attn Q weights): cache the
        # (H, tq, Dh) bf16 view once per q-tile; constant across the kv axis.
        qblk = q_ref[0].astype(jnp.bfloat16)                  # (tq, 3D)
        q_sc[...] = jnp.stack(
            [qblk[:, h * Dh:(h + 1) * Dh] for h in range(H)], axis=0)
        m_sc[...] = jnp.full_like(m_sc, -jnp.inf)
        l_sc[...] = jnp.zeros_like(l_sc)
        acc_sc[...] = jnp.zeros_like(acc_sc)

    # Skip kv tiles that lie entirely above the causal diagonal (~2x less work).
    @pl.when(ki * tkv <= qi * tq + tq - 1)
    def _():
        kvb = kv_ref[0].astype(jnp.bfloat16)                  # (tkv, 3D)
        k = jnp.stack(
            [kvb[:, D + h * Dh: D + (h + 1) * Dh] for h in range(H)], axis=0)
        v = jnp.stack(
            [kvb[:, 2 * D + h * Dh: 2 * D + (h + 1) * Dh] for h in range(H)],
            axis=0)                                           # (H, tkv, Dh)

        s = jnp.einsum("hqd,hkd->hqk", q_sc[...], k,
                       preferred_element_type=jnp.float32)    # (H, tq, tkv)

        # Causal mask from one 2-D compare, broadcast over heads.
        # masked_bias = -1e5/sqrt(d_head) preserves mask-before-scale ordering.
        row = qi * tq + jax.lax.broadcasted_iota(jnp.int32, (tq, tkv), 0)
        col = ki * tkv + jax.lax.broadcasted_iota(jnp.int32, (tq, tkv), 1)
        s = jnp.where((col <= row)[None], s, masked_bias)
        s = s + am_ref[0, 0]                                  # additive padding mask

        m_prev = m_sc[...]
        m_new = jnp.maximum(m_prev, jnp.max(s, axis=-1, keepdims=True))
        alpha = jnp.exp(m_prev - m_new)
        p = jnp.exp(s - m_new)
        l_sc[...] = alpha * l_sc[...] + jnp.sum(p, axis=-1, keepdims=True)
        acc_sc[...] = alpha * acc_sc[...] + jnp.einsum(
            "hqk,hkd->hqd", p.astype(jnp.bfloat16), v,
            preferred_element_type=jnp.float32)
        m_sc[...] = m_new

    @pl.when(ki == pl.num_programs(2) - 1)
    def _():
        inv_l = pl.reciprocal(l_sc[...], approx=False)        # exact; tiny cost
        out = acc_sc[...] * inv_l                             # (H, tq, Dh)
        # Head merge in-kernel -> lane-dense (tq, D) full-width store.
        merged = jnp.concatenate([out[h] for h in range(H)], axis=-1)
        o_ref[0] = merged.astype(o_ref.dtype)


def flash_attention_pallas(qkv, attn_mask, n_head, d_head, tq=256, tkv=512):
    """qkv: [B,S,3D] bf16 (q pre-scaled); attn_mask: [B,1,1,S] additive f32."""
    B, S, threeD = qkv.shape
    D = n_head * d_head
    assert threeD == 3 * D
    tq = _fit(S, tq, 8)
    tkv = _fit(S, tkv, 128)
    masked_bias = -100000.0 / math.sqrt(float(d_head))
    grid = (B, S // tq, S // tkv)
    return pl.pallas_call(
        partial(_flash_attn_kernel, n_head=n_head, d_head=d_head,
                masked_bias=masked_bias),
        out_shape=jax.ShapeDtypeStruct((B, S, D), jnp.bfloat16),
        grid=grid,
        in_specs=[
            # q rows: fetched once per (b, qi) (block index constant over ki)
            pl.BlockSpec((1, tq, 3 * D), lambda b, i, j: (b, i, 0)),
            # kv rows: streamed along the kv axis
            pl.BlockSpec((1, tkv, 3 * D), lambda b, i, j: (b, j, 0)),
            pl.BlockSpec((1, 1, 1, tkv), lambda b, i, j: (b, 0, 0, j)),
        ],
        out_specs=pl.BlockSpec((1, tq, D), lambda b, i, j: (b, i, 0)),
        scratch_shapes=[
            pltpu.VMEM((n_head, tq, d_head), jnp.bfloat16),   # cached Q heads
            pltpu.VMEM((n_head, tq, 1), jnp.float32),         # running max
            pltpu.VMEM((n_head, tq, 1), jnp.float32),         # running sum
            pltpu.VMEM((n_head, tq, d_head), jnp.float32),    # output accum
        ],
        compiler_params=pltpu.CompilerParams(
            dimension_semantics=("parallel", "parallel", "arbitrary"),
            vmem_limit_bytes=_VMEM_LIMIT),
    )(qkv, qkv, attn_mask)


# ----------------------------------------------------------------------------
# Model glue (plain JAX: embedding gathers, residual stream, kv_past outputs)
# ----------------------------------------------------------------------------

class Config:
    def __init__(self, n_embd=32, n_head=4, n_ctx=16, n_positions=16,
                 vocab_size=64, n_layer=2, layer_norm_epsilon=1e-5):
        self.n_embd = n_embd
        self.hidden_size = n_embd
        self.n_head = n_head
        self.n_ctx = n_ctx
        self.n_positions = n_positions
        self.vocab_size = vocab_size
        self.n_layer = n_layer
        self.layer_norm_epsilon = layer_norm_epsilon


def init_params(key, cfg):
    D = cfg.n_embd
    std = 0.02

    def normal(k, shape):
        return std * jax.random.normal(k, shape, dtype=jnp.float32)

    keys = jax.random.split(key, 2 + 4 * cfg.n_layer)
    params = {
        "wte": normal(keys[0], (cfg.vocab_size, D)),
        "wpe": normal(keys[1], (cfg.n_positions, D)),
        "blocks": [],
    }
    for i in range(cfg.n_layer):
        k0, k1, k2, k3 = keys[2 + 4 * i: 6 + 4 * i]
        params["blocks"].append({
            "ln1_g": jnp.ones((D,), jnp.float32),
            "ln1_b": jnp.zeros((D,), jnp.float32),
            "c_attn_w": normal(k0, (D, 3 * D)),          # Conv1D: [in, out]
            "c_attn_b": jnp.zeros((3 * D,), jnp.float32),
            "c_proj_w": normal(k1, (D, D)),
            "c_proj_b": jnp.zeros((D,), jnp.float32),
            "ln2_g": jnp.ones((D,), jnp.float32),
            "ln2_b": jnp.zeros((D,), jnp.float32),
            "fc1_w": normal(k2, (D, 4 * D)),
            "fc1_b": jnp.zeros((4 * D,), jnp.float32),
            "fc2_w": normal(k3, (4 * D, D)),
            "fc2_b": jnp.zeros((D,), jnp.float32),
        })
    return params


def transformer_block(p, cfg, x, attn_mask):
    B, S, D = x.shape
    H = cfg.n_head
    Dh = D // H
    eps = cfg.layer_norm_epsilon
    x2 = x.reshape(B * S, D)                                  # bf16 residual stream

    # --- attention path: LN1 fused into the qkv projection; 1/sqrt(d_head)
    #     folded into the Q third of c_attn (zero runtime cost). ---
    inv_scale = 1.0 / math.sqrt(float(Dh))
    qkv_scale = jnp.concatenate([jnp.full((D,), inv_scale, jnp.float32),
                                 jnp.ones((2 * D,), jnp.float32)])
    qkv = ln_linear_pallas(x2, p["ln1_g"], p["ln1_b"],
                           p["c_attn_w"] * qkv_scale[None, :],
                           p["c_attn_b"] * qkv_scale, eps)    # bf16 [B*S, 3D]
    qkv_b = qkv.reshape(B, S, 3 * D)

    # kv_past output in the reference [B,H,S,Dh] layout (off the attention
    # critical path; k/v here are unscaled).
    # TODO(synk): kv_past returned in bf16 (matmul precision); reference keeps f32.
    qkv5 = qkv_b.reshape(B, S, 3, H, Dh)
    kv_past = (jnp.transpose(qkv5[:, :, 1], (0, 2, 1, 3)),
               jnp.transpose(qkv5[:, :, 2], (0, 2, 1, 3)))

    a = flash_attention_pallas(qkv_b, attn_mask, H, Dh)       # bf16 [B,S,D] lane-dense
    a2 = a.reshape(B * S, D)

    # c_proj with the residual add (x) fused into the output writeback
    attn_out = linear_pallas(a2, p["c_proj_w"], p["c_proj_b"], residual=x2)

    # --- MLP path: LN2 fused into fc1 (+GELU); fc2 fuses the residual add ---
    f = ln_linear_pallas(attn_out, p["ln2_g"], p["ln2_b"],
                         p["fc1_w"], p["fc1_b"], eps, activation="gelu")
    out = linear_pallas(f, p["fc2_w"], p["fc2_b"], residual=attn_out)
    return out.reshape(B, S, D), kv_past


def gpt_forward(params, cfg, input_ids, attention_mask=None, position_ids=None):
    B, S = input_ids.shape
    tok = params["wte"][input_ids]                                # [B,S,D] f32

    if position_ids is None:
        if attention_mask is not None:
            position_ids = jnp.clip(
                attention_mask.astype(jnp.int32).cumsum(-1) - 1, 0,
                cfg.n_positions - 1)
        else:
            position_ids = jnp.broadcast_to(jnp.arange(S), (B, S))
    pos = params["wpe"][position_ids]                             # [B,S,D]

    if attention_mask is not None:
        am = attention_mask[:, None, None, :].astype(jnp.float32)
        # Clamped to -1e9 (instead of finfo.min) so fully-masked rows cannot
        # produce -inf/NaN in the softmax; numerically equivalent otherwise.
        am = (1.0 - am) * (-1e9)                                  # [B,1,1,S]
    else:
        am = jnp.zeros((B, 1, 1, S), jnp.float32)

    # Residual stream kept in bf16 (in-kernel accumulation stays f32).
    hidden = (tok + pos).astype(jnp.bfloat16)                     # dropout = id
    kv_pasts = []
    for p in params["blocks"]:
        hidden, kv = transformer_block(p, cfg, hidden, am)
        kv_pasts.append(kv)
    return hidden, kv_pasts


# ----------------------------------------------------------------------------
# main
# ----------------------------------------------------------------------------

if __name__ == "__main__":
    cfg = Config(n_embd=32, n_head=4, n_ctx=16, n_positions=16,
                 vocab_size=64, n_layer=2)

    root = jax.random.PRNGKey(0)
    k_params, k_ids = jax.random.split(root)

    params = init_params(k_params, cfg)

    B, S = 2, 8
    input_ids = jax.random.randint(k_ids, (B, S), 0, cfg.vocab_size,
                                   dtype=jnp.int32)
    attention_mask = jnp.ones((B, S), jnp.float32)

    hidden, kv_pasts = gpt_forward(params, cfg, input_ids, attention_mask)
    jax.block_until_ready(hidden)

    assert hidden.shape == (B, S, cfg.n_embd)
    assert len(kv_pasts) == cfg.n_layer
    print("KERNEL_OK")
</pallas_src>

<mosaic_0001>
module attributes {stable_mosaic.version = 11 : i64} {
  func.func @_ln_linear_kernel(%arg0: i32, %arg1: i32, %arg2: memref<16x32xbf16, #tpu.memory_space<vmem>>, %arg3: memref<1x32xf32, #tpu.memory_space<vmem>>, %arg4: memref<1x32xf32, #tpu.memory_space<vmem>>, %arg5: memref<32x96xbf16, #tpu.memory_space<vmem>>, %arg6: memref<1x96xf32, #tpu.memory_space<vmem>>, %arg7: memref<16x96xbf16, #tpu.memory_space<vmem>>, %arg8: memref<16x32xbf16, #tpu.memory_space<vmem>>) attributes {dimension_semantics = [#tpu.dimension_semantics<parallel>, #tpu.dimension_semantics<arbitrary>], iteration_bounds = array<i64: 1, 1>, scalar_prefetch = 0 : i64, scratch_operands = 1 : i64, tpu.core_type = #tpu.core_type<tc>, window_params = [{transform_indices = @transform_0, window_bounds = array<i64: 16, 32>}, {pipeline_mode = #tpu.pipeline_mode<synchronous>, transform_indices = @transform_1, window_bounds = array<i64: 1, 32>}, {pipeline_mode = #tpu.pipeline_mode<synchronous>, transform_indices = @transform_2, window_bounds = array<i64: 1, 32>}, {transform_indices = @transform_3, window_bounds = array<i64: 32, 96>}, {transform_indices = @transform_4, window_bounds = array<i64: 1, 96>}, {transform_indices = @transform_5, window_bounds = array<i64: 16, 96>}]} {
    %c0_i32 = arith.constant 0 : i32
    %0 = arith.cmpi eq, %arg1, %c0_i32 : i32
    %1 = arith.extui %0 : i1 to i32
    %c0_i32_0 = arith.constant 0 : i32
    %2 = arith.cmpi ne, %1, %c0_i32_0 : i32
    scf.if %2 {
      %c0_8 = arith.constant 0 : index
      %c0_9 = arith.constant 0 : index
      %11 = vector.load %arg2[%c0_8, %c0_9] : memref<16x32xbf16, #tpu.memory_space<vmem>>, vector<16x32xbf16>
      %12 = arith.extf %11 : vector<16x32xbf16> to vector<16x32xf32>
      %cst_10 = arith.constant dense<0.000000e+00> : vector<16xf32>
      %13 = vector.multi_reduction <add>, %12, %cst_10 [1] : vector<16x32xf32> to vector<16xf32>
      %14 = vector.shape_cast %13 : vector<16xf32> to vector<16x1xf32>
      %cst_11 = arith.constant 3.200000e+01 : f32
      %15 = vector.broadcast %cst_11 : f32 to vector<16x1xf32>
      %16 = arith.divf %14, %15 : vector<16x1xf32>
      %17 = vector.broadcast %16 : vector<16x1xf32> to vector<16x32xf32>
      %18 = arith.subf %12, %17 : vector<16x32xf32>
      %19 = arith.mulf %18, %18 : vector<16x32xf32>
      %cst_12 = arith.constant dense<0.000000e+00> : vector<16xf32>
      %20 = vector.multi_reduction <add>, %19, %cst_12 [1] : vector<16x32xf32> to vector<16xf32>
      %21 = vector.shape_cast %20 : vector<16xf32> to vector<16x1xf32>
      %cst_13 = arith.constant 3.200000e+01 : f32
      %22 = vector.broadcast %cst_13 : f32 to vector<16x1xf32>
      %23 = arith.divf %21, %22 : vector<16x1xf32>
      %24 = vector.broadcast %16 : vector<16x1xf32> to vector<16x32xf32>
      %25 = arith.subf %12, %24 : vector<16x32xf32>
      %cst_14 = arith.constant 9.99999974E-6 : f32
      %26 = vector.broadcast %cst_14 : f32 to vector<16x1xf32>
      %27 = arith.addf %23, %26 : vector<16x1xf32>
      %28 = math.rsqrt %27 : vector<16x1xf32>
      %29 = vector.broadcast %28 : vector<16x1xf32> to vector<16x32xf32>
      %30 = arith.mulf %25, %29 : vector<16x32xf32>
      %c0_15 = arith.constant 0 : index
      %c0_16 = arith.constant 0 : index
      %31 = vector.load %arg3[%c0_15, %c0_16] : memref<1x32xf32, #tpu.memory_space<vmem>>, vector<1x32xf32>
      %32 = vector.broadcast %31 : vector<1x32xf32> to vector<16x32xf32>
      %33 = arith.mulf %30, %32 : vector<16x32xf32>
      %c0_17 = arith.constant 0 : index
      %c0_18 = arith.constant 0 : index
      %34 = vector.load %arg4[%c0_17, %c0_18] : memref<1x32xf32, #tpu.memory_space<vmem>>, vector<1x32xf32>
      %35 = vector.broadcast %34 : vector<1x32xf32> to vector<16x32xf32>
      %36 = arith.addf %33, %35 : vector<16x32xf32>
      %37 = arith.truncf %36 : vector<16x32xf32> to vector<16x32xbf16>
      %c0_19 = arith.constant 0 : index
      %c0_20 = arith.constant 0 : index
      %38 = vector.load %arg8[%c0_19, %c0_20] : memref<16x32xbf16, #tpu.memory_space<vmem>>, vector<16x32xbf16>
      tpu.vector_store %arg8[%c0_19, %c0_20], %37 {strides = array<i32>} : memref<16x32xbf16, #tpu.memory_space<vmem>>, vector<16x32xbf16>,
    } else {
    }
    %c0 = arith.constant 0 : index
    %c0_1 = arith.constant 0 : index
    %3 = vector.load %arg8[%c0, %c0_1] : memref<16x32xbf16, #tpu.memory_space<vmem>>, vector<16x32xbf16>
    %c0_2 = arith.constant 0 : index
    %c0_3 = arith.constant 0 : index
    %4 = vector.load %arg5[%c0_2, %c0_3] : memref<32x96xbf16, #tpu.memory_space<vmem>>, vector<32x96xbf16>
    %cst = arith.constant dense<0.000000e+00> : vector<16x96xf32>
    %5 = tpu.matmul %3, %4, %cst {dimension_numbers = #tpu.dot_dimension_numbers<[1], [0], [0], [1], [0, 0, 1, 1], [], []>} : vector<16x32xbf16>, vector<32x96xbf16>, vector<16x96xf32> -> vector<16x96xf32>
    %c0_4 = arith.constant 0 : index
    %c0_5 = arith.constant 0 : index
    %6 = vector.load %arg6[%c0_4, %c0_5] : memref<1x96xf32, #tpu.memory_space<vmem>>, vector<1x96xf32>
    %7 = vector.broadcast %6 : vector<1x96xf32> to vector<16x96xf32>
    %8 = arith.addf %5, %7 : vector<16x96xf32>
    %9 = arith.truncf %8 : vector<16x96xf32> to vector<16x96xbf16>
    %c0_6 = arith.constant 0 : index
    %c0_7 = arith.constant 0 : index
    %10 = vector.load %arg7[%c0_6, %c0_7] : memref<16x96xbf16, #tpu.memory_space<vmem>>, vector<16x96xbf16>
    tpu.vector_store %arg7[%c0_6, %c0_7], %9 {strides = array<i32>} : memref<16x96xbf16, #tpu.memory_space<vmem>>, vector<16x96xbf16>,
    return
  }
  func.func @transform_0(%arg0: i32, %arg1: i32) -> (i32, i32) {
    %c0_i32 = arith.constant 0 : i32
    %c0_i32_0 = arith.constant 0 : i32
    return %arg0, %c0_i32 : i32, i32
  }
  func.func @transform_1(%arg0: i32, %arg1: i32) -> (i32, i32) {
    %c0_i32 = arith.constant 0 : i32
    %c0_i32_0 = arith.constant 0 : i32
    %c0_i32_1 = arith.constant 0 : i32
    return %c0_i32, %c0_i32_0 : i32, i32
  }
  func.func @transform_2(%arg0: i32, %arg1: i32) -> (i32, i32) {
    %c0_i32 = arith.constant 0 : i32
    %c0_i32_0 = arith.constant 0 : i32
    %c0_i32_1 = arith.constant 0 : i32
    return %c0_i32, %c0_i32_0 : i32, i32
  }
  func.func @transform_3(%arg0: i32, %arg1: i32) -> (i32, i32) {
    %c0_i32 = arith.constant 0 : i32
    %c0_i32_0 = arith.constant 0 : i32
    return %c0_i32, %arg1 : i32, i32
  }
  func.func @transform_4(%arg0: i32, %arg1: i32) -> (i32, i32) {
    %c0_i32 = arith.constant 0 : i32
    %c0_i32_0 = arith.constant 0 : i32
    return %c0_i32, %arg1 : i32, i32
  }
  func.func @transform_5(%arg0: i32, %arg1: i32) -> (i32, i32) {
    %c0_i32 = arith.constant 0 : i32
    return %arg0, %arg1 : i32, i32
  }
}

</mosaic_0001>

<llo_original>
// kernel: tpu_custom_call.1
$region0: #{tpu_custom_call.1}
  #allocation0 [shape = 'u32[]', space=smem, size = 0x4, offset = 0x4, fixed_abs, tag = 'smem constant byte address 0x4 - core index']
  #allocation1 [shape = 'u32[144,128]{1,0:T(1,128)}', space=vmem, size = 0x12000, scoped, tag = 'internal scratch']
  #allocation2 [shape = 'bf16[16,32]{1,0:T(16,128)(2,1)}', space=vmem, size = 0x1000, scoped, tag = 'scratch operand']
  %s0 = inlined_call_operand.hbm [shape: bf16[16,32], index: 0, kind: input, shape index: {}]
  %s1 = inlined_call_operand.vmem [shape: f32[1,32], index: 1, kind: input, shape index: {}]
  %s2 = inlined_call_operand.vmem [shape: f32[1,32], index: 2, kind: input, shape index: {}]
  %s3 = inlined_call_operand.hbm [shape: bf16[32,96], index: 3, kind: input, shape index: {}]
  %s4 = inlined_call_operand.vmem [shape: f32[1,96], index: 4, kind: input, shape index: {}]
  %s5 = inlined_call_operand.hbm [shape: bf16[16,96], index: 5, kind: output, shape index: {}]
  %s6 = sld [smem:[#allocation0]]
  $region42: #{tpu_custom_call.1} parent=0
    _
  %s8 = ssub.s32 1, %s6
  %s9 = scalar_select 0, %s8, %s6
  $region1: #{tpu_custom_call.1} parent=0
    #allocation3 [shape = 'u8[4096]{0}', space=vmem, size = 0x1000, scoped, tag = 'input window, operand 0, single buffered']
    #allocation4 [shape = 's32[1]{0}', space=sflag, size = 0x4, scoped, tag = 'scoped memory for tpu_custom_call.1']
    #allocation5 [shape = 's32[1]{0}', space=sflag, size = 0x4, scoped, tag = 'scoped memory for tpu_custom_call.1']
    #allocation6 [shape = 'u8[8192]{0}', space=vmem, size = 0x2000, scoped, tag = 'input window, operand 3, single buffered']
    #allocation7 [shape = 's32[1]{0}', space=sflag, size = 0x4, scoped, tag = 'scoped memory for tpu_custom_call.1']
    #allocation8 [shape = 'u8[4096]{0}', space=vmem, size = 0x1000, scoped, tag = 'output window, operand 0, single buffered']
    %10 = vsyncpa [#allocation4], 0
    %11 = vsyncpa [#allocation7], 0
    %12 = vsyncpa [#allocation5], 0
    // Predicated region
    $region2: #{tpu_custom_call.1} parent=1 // pred_check
      _
    $region3: #{tpu_custom_call.1} parent=1 // pred_check_branch
      %14 = sbr.rel (0) target = $region5
    $region4: #{tpu_custom_call.1} parent=1 // pred_region
      %s16 = ssub.s32 128, 128
      %17 = vsyncadd [#allocation4], %s16
      %s18 = sshll.u32 [#allocation3], 4
      %s19 = int_to_ptr.vmem [resolvable:$true] %s18
      %24 = dma.hbm_to_vmem [thread:$0]  %s0, 128, %s19, [#allocation4], 64, 64, 4
    $region5: #{tpu_custom_call.1} parent=1 // pred_fallthru
      _
    // Predicated region
    $region6: #{tpu_custom_call.1} parent=1 // pred_check
      _
    $region7: #{tpu_custom_call.1} parent=1 // pred_check_branch
      %26 = sbr.rel (0) target = $region9
    $region8: #{tpu_custom_call.1} parent=1 // pred_region
      _
    $region9: #{tpu_custom_call.1} parent=1 // pred_fallthru
      _
    // Predicated region
    $region10: #{tpu_custom_call.1} parent=1 // pred_check
      _
    $region11: #{tpu_custom_call.1} parent=1 // pred_check_branch
      %28 = sbr.rel (0) target = $region13
    $region12: #{tpu_custom_call.1} parent=1 // pred_region
      _
    $region13: #{tpu_custom_call.1} parent=1 // pred_fallthru
      _
    // Predicated region
    $region14: #{tpu_custom_call.1} parent=1 // pred_check
      _
    $region15: #{tpu_custom_call.1} parent=1 // pred_check_branch
      %30 = sbr.rel (0) target = $region17
    $region16: #{tpu_custom_call.1} parent=1 // pred_region
      %s32 = ssub.s32 256, 256
      %33 = vsyncadd [#allocation7], %s32
      %s34 = sshll.u32 [#allocation6], 4
      %s35 = int_to_ptr.vmem [resolvable:$true] %s34
      %40 = dma.hbm_to_vmem [thread:$0]  %s3, 256, %s35, [#allocation7], 64, 64, 4
    $region17: #{tpu_custom_call.1} parent=1 // pred_fallthru
      _
    // Predicated region
    $region18: #{tpu_custom_call.1} parent=1 // pred_check
      _
    $region19: #{tpu_custom_call.1} parent=1 // pred_check_branch
      %42 = sbr.rel (0) target = $region21
    $region20: #{tpu_custom_call.1} parent=1 // pred_region
      _
    $region21: #{tpu_custom_call.1} parent=1 // pred_fallthru
      _
    // Predicated region
    $region22: #{tpu_custom_call.1} parent=1 // pred_check
      _
    $region23: #{tpu_custom_call.1} parent=1 // pred_check_branch
      %44 = sbr.rel (0) target = $region25
    $region24: #{tpu_custom_call.1} parent=1 // pred_region
      %45 = dma.done [#allocation4], 128
    $region25: #{tpu_custom_call.1} parent=1 // pred_fallthru
      _
    // Predicated region
    $region26: #{tpu_custom_call.1} parent=1 // pred_check
      _
    $region27: #{tpu_custom_call.1} parent=1 // pred_check_branch
      %47 = sbr.rel (0) target = $region29
    $region28: #{tpu_custom_call.1} parent=1 // pred_region
      %48 = dma.done [#allocation7], 256
    $region29: #{tpu_custom_call.1} parent=1 // pred_fallthru
      _
    %p50 = scmp.eq.s32.totalorder 0, 0
    // Predicated region
    $region30: #{tpu_custom_call.1} parent=1 // pred_check
      %p51 = pneg %p50
    $region31: #{tpu_custom_call.1} parent=1 // pred_check_branch
      %53 = sbr.rel (%p51) target = $region33
    $region32: #{tpu_custom_call.1} parent=1 // pred_region
      %v54 = vld [vmem:[#allocation3] sm:$0xf]
      %v55 = vld [vmem:[#allocation3 + $0x4] sm:$0xf]
      %v56 = vunpack.c.l.bf16 %v54
      %v57 = vunpack.c.l.bf16 %v55
      %vm58 = vcmask 261120
      %v59 = vsel %vm58, %v56, 0.0
      %60 = vadd.xlane.f32.xlu0 %v59
      %v61 = vpop.xlane.xlu0 %60
      %v62 = vsel %vm58, %v57, 0.0
      %63 = vadd.xlane.f32.xlu0 %v62
      %v64 = vpop.xlane.xlu0 %63
      %v65 = vrcp.pop 32.0
      %v66 = vmul.f32 %v61, %v65
      %v67 = vmul.f32 %v64, %v65
      %v68 = vsub.f32 %v56, %v66
      %v69 = vsub.f32 %v57, %v67
      %v70 = vmul.f32 %v68, %v68
      %v71 = vmul.f32 %v69, %v69
      %v72 = vsel %vm58, %v70, 0.0
      %73 = vadd.xlane.f32.xlu0 %v72
      %v74 = vpop.xlane.xlu0 %73
      %v75 = vsel %vm58, %v71, 0.0
      %76 = vadd.xlane.f32.xlu0 %v75
      %v77 = vpop.xlane.xlu0 %76
      %v78 = vmul.f32 %v74, %v65
      %v79 = vmul.f32 %v77, %v65
      %v80 = vadd.f32 %v78, 1e-05
      %v81 = vadd.f32 %v79, 1e-05
      %v82 = vrsqrt.pop %v80
      %v83 = vrsqrt.pop %v81
      %v84 = vmul.f32 %v68, %v82
      %v85 = vmul.f32 %v69, %v83
      %v86 = vld [vmem:[%s1] sm:$0x1]
      %v88 = vlaneseq
      %v89 = vshrl.u32 %v88, 7
      %v90 = vsub.s32 0, %v89
      %v91 = vrot.slane %v86, %v90
      %v93 = vmul.f32 %v84, %v91
      %v94 = vmul.f32 %v85, %v91
      %v95 = vld [vmem:[%s2] sm:$0x1]
      %v97 = vlaneseq
      %v98 = vshrl.u32 %v97, 7
      %v99 = vsub.s32 0, %v98
      %v100 = vrot.slane %v95, %v99
      %v102 = vadd.f32 %v93, %v100
      %v103 = vadd.f32 %v94, %v100
      %v104 = vpack.c.bf16 %v103, %v102
      %105 = vst.msk [vmem:[#allocation2] sm:$0xff] %vm58, %v104
    $region33: #{tpu_custom_call.1} parent=1 // pred_fallthru
      _
    %v106 = vld [vmem:[#allocation2] sm:$0xff]
    %v107 = vld [vmem:[#allocation6] sm:$0xf]
    %v108 = vld [vmem:[#allocation6 + $0x4] sm:$0xf]
    %v109 = vld [vmem:[#allocation6 + $0x8] sm:$0xf]
    %v110 = vld [vmem:[#allocation6 + $0xc] sm:$0xf]
    %v111 = vld [vmem:[%s4] sm:$0x1]
    %v113 = vlaneseq
    %v114 = vshrl.u32 %v113, 7
    %v115 = vsub.s32 0, %v114
    %v116 = vrot.slane %v111, %v115
    %v122 = vunpack.c.l.b16 %v107
    %v123 = vunpack.c.l.b16 %v108
    %v124 = vunpack.c.l.b16 %v109
    %v125 = vunpack.c.l.b16 %v110
    %v126 = vpack.c.b16 %v123, %v122
    %v127 = vpack.c.b16 %v125, %v124
    %vm130 = vcmask 261120
    %v132 = vsel %vm130, %v106, 0
    %134 = vmatprep.subr.bf16.mxu0 0
    %135 = vmatpush1.bf16.msra.mxu0 %v126
    %136 = vmatprep.subr.bf16.mxu0 0
    %137 = vmatpush1.bf16.msra.mxu0 %v127
    %138 = vmatprep.subr.bf16.mxu0 0
    %139 = vmatpush1.bf16.msra.mxu0 0
    %140 = vmatprep.subr.bf16.mxu0 0
    %141 = vmatpush1.bf16.msra.mxu0 0
    %142 = vmatprep.subr.bf16.mxu0 0
    %143 = vmatpush1.bf16.msra.mxu0 0
    %144 = vmatprep.subr.bf16.mxu0 0
    %145 = vmatpush1.bf16.msra.mxu0 0
    %146 = vmatprep.subr.bf16.mxu0 0
    %147 = vmatpush1.bf16.msra.mxu0 0
    %148 = vmatprep.subr.bf16.mxu0 0
    %149 = vmatpush1.bf16.msra.mxu0 0
    %150 = vmatprep.subr.bf16.mxu0 0
    %151 = vmatpush1.bf16.msra.mxu0 0
    %152 = vmatprep.subr.bf16.mxu0 0
    %153 = vmatpush1.bf16.msra.mxu0 0
    %154 = vmatprep.subr.bf16.mxu0 0
    %155 = vmatpush1.bf16.msra.mxu0 0
    %156 = vmatprep.subr.bf16.mxu0 0
    %157 = vmatpush1.bf16.msra.mxu0 0
    %158 = vmatprep.subr.bf16.mxu0 0
    %159 = vmatpush1.bf16.msra.mxu0 0
    %160 = vmatprep.subr.bf16.mxu0 0
    %161 = vmatpush1.bf16.msra.mxu0 0
    %162 = vmatprep.subr.bf16.mxu0 0
    %163 = vmatpush1.bf16.msra.mxu0 0
    %164 = vmatprep.subr.bf16.mxu0 0
    %165 = vmatpush1.bf16.msra.mxu0 0
    %166 = vmatprep.mubr.bf16.mxu0 0
    %167 = vmatmul.mubr.bf16.gmra.mrb[0].mxu0 %v132
    %v168 = vpop.f32.mrb[0].mxu0
    %v169 = vadd.f32 %v116, %v168
    %v170 = vpop.f32.mrb[0].mxu0
    %v171 = vpop.f32.mrb[0].mxu0
    %v172 = vadd.f32 %v116, %v171
    %v173 = vpop.f32.mrb[0].mxu0
    %174 = vdwg.mxu0
    %v175 = vpack.c.bf16 %v172, %v169
    %v177 = vunpack.c.l.b16 %v175
    %v178 = vunpack.c.h.b16 %v175
    %v179 = vpack.c.b16 %v177, %v177
    %v180 = vpack.c.b16 %v178, %v178
    %vm183 = vcmask 781312
    %184 = vst.msk [vmem:[#allocation8] sm:$0xf] %vm183, %v179
    %185 = vst.msk [vmem:[#allocation8 + $0x4] sm:$0xf] %vm183, %v180
    // Predicated region
    $region34: #{tpu_custom_call.1} parent=1 // pred_check
      _
    $region35: #{tpu_custom_call.1} parent=1 // pred_check_branch
      %187 = sbr.rel (0) target = $region37
    $region36: #{tpu_custom_call.1} parent=1 // pred_region
      %s189 = ssub.s32 128, 128
      %190 = vsyncadd [#allocation5], %s189
      %s191 = sshll.u32 [#allocation8], 4
      %s192 = int_to_ptr.vmem [resolvable:$true] %s191
      %197 = dma.vmem_to_hbm [thread:$0]  %s192, 128, %s5, [#allocation5], 64, 64, 4
    $region37: #{tpu_custom_call.1} parent=1 // pred_fallthru
      _
    // Predicated region
    $region38: #{tpu_custom_call.1} parent=1 // pred_check
      _
    $region39: #{tpu_custom_call.1} parent=1 // pred_check_branch
      %199 = sbr.rel (0) target = $region41
    $region40: #{tpu_custom_call.1} parent=1 // pred_region
      %200 = dma.done [#allocation5], 128
    $region41: #{tpu_custom_call.1} parent=1 // pred_fallthru
      _
    %201 = vsyncpa [#allocation4], 1
    %202 = vsyncpa [#allocation7], 1
    %203 = vsyncpa [#allocation5], 1

</llo_original>
